<compile_context>
chip_gen: v5e
topology: v5e:2x2
jax: 0.10.0
libtpu: 0.0.40
codegen_flags: <defaults>
</compile_context>

<pallas_src>
import numpy as np
import jax
import jax.numpy as jnp
from jax.experimental import pallas as pl
from jax.experimental.pallas import tpu as pltpu


def _round_up(x, m):
    return ((x + m - 1) // m) * m


def _padded_tile_bytes(shape, itemsize=4):
    """VMEM bytes of one tile after the last two dims pad to (8, 128)."""
    shape = tuple(int(s) for s in shape)
    if len(shape) < 2:
        shape = (1,) + shape
    *lead, sub, lane = shape
    n = 1
    for x in lead:
        n *= x
    return n * _round_up(sub, 8) * _round_up(lane, 128) * itemsize


def _vmem_caps_bytes():
    """(budget, physical) VMEM bytes; generation aware with a safe fallback."""
    try:
        phys = int(pltpu.get_tpu_info().vmem_capacity_bytes)
    except Exception:
        phys = None
    if phys is None:
        return 32 * 1024 * 1024, 64 * 1024 * 1024
    if phys <= 64 * 1024 * 1024:            # v7x-class TensorCore (64 MiB)
        return 40 * 1024 * 1024, phys
    return 64 * 1024 * 1024, phys            # v5e / v6e (128 MiB physical)


def _largest_divisor_leq(n, cap):
    cap = max(1, min(n, cap))
    for t in range(cap, 0, -1):
        if n % t == 0:
            return t
    return 1


def _pick_query_tile(n_query, cap=512):
    """Full axis if small; otherwise the biggest divisor that is a multiple of 8."""
    if n_query <= cap:
        return n_query
    for t in range(cap, 7, -1):
        if t % 8 == 0 and n_query % t == 0:
            return t
    return n_query                           # no legal divisor: keep the full axis


def _protonet_kernel(labels_ref, q_ref, s_ref, scale_ref, out_ref):
    # Per-grid-step block:
    #   labels_ref : (TB, S, 1)      int32  (VMEM)
    #   q_ref      : (TB, TQ, D)     f32
    #   s_ref      : (TB, S, D)      f32
    #   scale_ref  : (1,)            f32    (SMEM)
    #   out_ref    : (TB, TQ, n_way) f32    (stored at its true width)
    q = q_ref[...]
    s = s_ref[...]
    labels = labels_ref[...]                                   # (TB, S, 1)

    tb, tq, d = q.shape
    n_support = s.shape[1]
    n_way = out_ref.shape[-1]
    lanes = _round_up(max(n_way, 1), 128)                      # internal lane width only

    # One-hot with the "way" axis on lanes: (TB, S, LANES).
    way_ids = jax.lax.broadcasted_iota(jnp.int32, (tb, n_support, lanes), 2)
    onehot = (labels == way_ids).astype(jnp.float32)

    # Class counts -> tiny reciprocal, then a cheap multiply on the big tensor.
    counts = jnp.sum(onehot, axis=1, keepdims=True)            # (TB, 1, LANES)
    inv_counts = 1.0 / jnp.maximum(counts, 1.0)                # guard empty classes

    # Transposed prototypes (TB, D, LANES): already oriented for q @ protoT.
    protoT = jnp.einsum('tsd,tsw->tdw', s, onehot,
                        preferred_element_type=jnp.float32)
    protoT = protoT * inv_counts

    # Squared-Euclidean logits with constants folded:
    #   logits = (scale/d) * (2*q.p - ||q||^2 - ||p||^2)
    aa = jnp.sum(q * q, axis=2, keepdims=True)                 # (TB, TQ, 1)
    bb = jnp.sum(protoT * protoT, axis=1, keepdims=True)       # (TB, 1, LANES)
    ab = jnp.einsum('tqd,tdw->tqw', q, protoT,
                    preferred_element_type=jnp.float32)        # (TB, TQ, LANES)

    c = scale_ref[0] * (1.0 / d)
    logits = c * (2.0 * ab - aa - bb)
    out_ref[...] = logits[:, :, :n_way].astype(out_ref.dtype)


def classification_head_proto(query, support, support_labels, n_way, n_shot,
                              scale, normalize=True, task_block=None,
                              query_block=None, vmem_budget_bytes=None):
    """ProtoNet classification head with learnable scale, Pallas TPU kernel."""
    tasks, n_query, d = query.shape
    _, n_support, _ = support.shape
    assert n_support == n_way * n_shot
    assert normalize  # normalize=True path (divide by d) is folded into the kernel

    lanes = _round_up(max(n_way, 1), 128)

    budget, phys = _vmem_caps_bytes()
    if vmem_budget_bytes is not None:
        budget = int(vmem_budget_bytes)

    tq = int(query_block) if query_block is not None else _pick_query_tile(n_query)
    assert n_query % tq == 0

    # Layout-padded per-task VMEM footprint for one grid step:
    # double-buffered pipelined I/O + single-buffered in-kernel temporaries.
    io_bytes = 2 * (_padded_tile_bytes((tq, d))                # query block
                    + _padded_tile_bytes((n_support, d))       # support block
                    + _padded_tile_bytes((n_support, 1))       # labels block (int32)
                    + _padded_tile_bytes((tq, n_way)))         # output block (true width)
    tmp_bytes = (_padded_tile_bytes((n_support, lanes))        # onehot
                 + _padded_tile_bytes((d, lanes))              # protoT
                 + 2 * _padded_tile_bytes((tq, lanes))         # ab + logits
                 + _padded_tile_bytes((tq, 1))                 # aa
                 + 3 * _padded_tile_bytes((1, lanes)))         # counts / inv / bb
    per_task_bytes = io_bytes + tmp_bytes

    if task_block is None:
        cap = max(1, int(budget * 0.8) // per_task_bytes)
        if tasks >= 2:
            cap = min(cap, (tasks + 1) // 2)   # keep >=2 grid steps (v7x megacore)
        tb = _largest_divisor_leq(tasks, cap)  # divisor -> no jnp.pad of query/support
    else:
        tb = int(task_block)
        assert tasks % tb == 0

    vmem_limit = int(min(max(budget, tb * per_task_bytes * 5 // 4),
                         int(phys * 0.9)))

    labels3 = support_labels.astype(jnp.int32).reshape(tasks, n_support, 1)
    scale1 = jnp.asarray(scale, dtype=jnp.float32).reshape(1)

    grid = (tasks // tb, n_query // tq)

    return pl.pallas_call(
        _protonet_kernel,
        out_shape=jax.ShapeDtypeStruct((tasks, n_query, n_way), jnp.float32),
        grid=grid,
        in_specs=[
            pl.BlockSpec((tb, n_support, 1), lambda t, qi: (t, 0, 0)),   # labels
            pl.BlockSpec((tb, tq, d), lambda t, qi: (t, qi, 0)),         # query
            pl.BlockSpec((tb, n_support, d), lambda t, qi: (t, 0, 0)),   # support
            pl.BlockSpec(memory_space=pltpu.MemorySpace.SMEM),           # scale (1,)
        ],
        out_specs=pl.BlockSpec((tb, tq, n_way), lambda t, qi: (t, qi, 0)),
        compiler_params=pltpu.CompilerParams(
            dimension_semantics=("parallel", "parallel"),
            vmem_limit_bytes=vmem_limit),
    )(labels3, query, support, scale1)


def _protonet_ref(query, support, support_labels, n_way, n_shot, scale):
    """Plain-JAX reference mirroring the PyTorch ProtoNetHead + scale."""
    tasks, n_query, d = query.shape
    onehot = jax.nn.one_hot(support_labels, n_way, dtype=jnp.float32)
    onehot_t = jnp.transpose(onehot, (0, 2, 1))                 # (T, n_way, n_support)
    proto = jnp.einsum('tws,tsd->twd', onehot_t, support,
                       precision=jax.lax.Precision.HIGHEST)
    proto = proto / jnp.sum(onehot_t, axis=2, keepdims=True)
    aa = jnp.sum(query ** 2, axis=2, keepdims=True)
    bb = jnp.sum(proto ** 2, axis=2)[:, None, :]
    ab = jnp.einsum('tqd,twd->tqw', query, proto,
                    precision=jax.lax.Precision.HIGHEST)
    logits = -(aa - 2.0 * ab + bb) / d
    return scale[0] * logits


if __name__ == "__main__":
    key = jax.random.PRNGKey(0)
    tasks, n_way, n_shot, n_query, d = 2, 4, 2, 8, 32
    n_support = n_way * n_shot

    kq, ks = jax.random.split(key, 2)
    query = jax.random.normal(kq, (tasks, n_query, d), dtype=jnp.float32)
    support = jax.random.normal(ks, (tasks, n_support, d), dtype=jnp.float32)
    # deterministic balanced labels: each class appears n_shot times per task
    support_labels = jnp.tile(jnp.arange(n_way, dtype=jnp.int32), (tasks, n_shot))

    # nn.Parameter(torch.FloatTensor([1.0])) -> deterministic scale = 1.0
    scale = jnp.array([1.0], dtype=jnp.float32)

    out = classification_head_proto(query, support, support_labels,
                                    n_way, n_shot, scale)
    out = jax.block_until_ready(out)

    ref = _protonet_ref(query, support, support_labels, n_way, n_shot, scale)
    assert out.shape == (tasks, n_query, n_way)
    np.testing.assert_allclose(np.asarray(out), np.asarray(ref),
                               rtol=1e-4, atol=1e-4)
    print("KERNEL_OK")
</pallas_src>

<mosaic_0001>
module attributes {stable_mosaic.version = 11 : i64} {
  func.func @_protonet_kernel(%arg0: i32, %arg1: i32, %arg2: memref<1x8x1xi32, #tpu.memory_space<vmem>>, %arg3: memref<1x8x32xf32, #tpu.memory_space<vmem>>, %arg4: memref<1x8x32xf32, #tpu.memory_space<vmem>>, %arg5: memref<1xf32, #tpu.memory_space<smem>>, %arg6: memref<1x8x4xf32, #tpu.memory_space<vmem>>) attributes {dimension_semantics = [#tpu.dimension_semantics<parallel>, #tpu.dimension_semantics<parallel>], iteration_bounds = array<i64: 2, 1>, scalar_prefetch = 0 : i64, scratch_operands = 0 : i64, tpu.core_type = #tpu.core_type<tc>, window_params = [{transform_indices = @transform_0, window_bounds = array<i64: 1, 8, 1>}, {transform_indices = @transform_1, window_bounds = array<i64: 1, 8, 32>}, {transform_indices = @transform_2, window_bounds = array<i64: 1, 8, 32>}, {transform_indices = @transform_3, window_bounds = array<i64: 1>}, {transform_indices = @transform_4, window_bounds = array<i64: 1, 8, 4>}]} {
    %c0 = arith.constant 0 : index
    %c0_0 = arith.constant 0 : index
    %c0_1 = arith.constant 0 : index
    %0 = vector.load %arg3[%c0, %c0_0, %c0_1] : memref<1x8x32xf32, #tpu.memory_space<vmem>>, vector<1x8x32xf32>
    %c0_2 = arith.constant 0 : index
    %c0_3 = arith.constant 0 : index
    %c0_4 = arith.constant 0 : index
    %1 = vector.load %arg4[%c0_2, %c0_3, %c0_4] : memref<1x8x32xf32, #tpu.memory_space<vmem>>, vector<1x8x32xf32>
    %c0_5 = arith.constant 0 : index
    %c0_6 = arith.constant 0 : index
    %c0_7 = arith.constant 0 : index
    %2 = vector.load %arg2[%c0_5, %c0_6, %c0_7] : memref<1x8x1xi32, #tpu.memory_space<vmem>>, vector<1x8x1xi32>
    %3 = tpu.iota {dimensions = array<i32: 2>} : vector<1x8x128xi32>
    %4 = vector.broadcast %2 : vector<1x8x1xi32> to vector<1x8x128xi32>
    %5 = arith.cmpi eq, %4, %3 : vector<1x8x128xi32>
    %6 = arith.extui %5 : vector<1x8x128xi1> to vector<1x8x128xi32>
    %7 = arith.sitofp %6 : vector<1x8x128xi32> to vector<1x8x128xf32>
    %cst = arith.constant dense<0.000000e+00> : vector<1x128xf32>
    %8 = vector.multi_reduction <add>, %7, %cst [1] : vector<1x8x128xf32> to vector<1x128xf32>
    %9 = vector.shape_cast %8 : vector<1x128xf32> to vector<1x1x128xf32>
    %cst_8 = arith.constant 1.000000e+00 : f32
    %10 = vector.broadcast %cst_8 : f32 to vector<1x1x128xf32>
    %11 = arith.maximumf %9, %10 : vector<1x1x128xf32>
    %cst_9 = arith.constant 1.000000e+00 : f32
    %12 = vector.broadcast %cst_9 : f32 to vector<1x1x128xf32>
    %13 = arith.divf %12, %11 : vector<1x1x128xf32>
    "tpu.trace_start"() <{level = 10 : i32, message = "tsd,tsw->tdw"}> : () -> ()
    %cst_10 = arith.constant dense<0.000000e+00> : vector<1x32x128xf32>
    %14 = tpu.matmul %1, %7, %cst_10 {dimension_numbers = #tpu.dot_dimension_numbers<[1], [1], [2], [2], [0, 0, 0, 2, 1, 2], [0], [0]>} : vector<1x8x32xf32>, vector<1x8x128xf32>, vector<1x32x128xf32> -> vector<1x32x128xf32>
    "tpu.trace_stop"() : () -> ()
    %15 = vector.broadcast %13 : vector<1x1x128xf32> to vector<1x32x128xf32>
    %16 = arith.mulf %14, %15 : vector<1x32x128xf32>
    %17 = arith.mulf %0, %0 : vector<1x8x32xf32>
    %cst_11 = arith.constant dense<0.000000e+00> : vector<1x8xf32>
    %18 = vector.multi_reduction <add>, %17, %cst_11 [2] : vector<1x8x32xf32> to vector<1x8xf32>
    %19 = vector.shape_cast %18 : vector<1x8xf32> to vector<1x8x1xf32>
    %20 = arith.mulf %16, %16 : vector<1x32x128xf32>
    %cst_12 = arith.constant dense<0.000000e+00> : vector<1x128xf32>
    %21 = vector.multi_reduction <add>, %20, %cst_12 [1] : vector<1x32x128xf32> to vector<1x128xf32>
    %22 = vector.shape_cast %21 : vector<1x128xf32> to vector<1x1x128xf32>
    "tpu.trace_start"() <{level = 10 : i32, message = "tqd,tdw->tqw"}> : () -> ()
    %cst_13 = arith.constant dense<0.000000e+00> : vector<1x8x128xf32>
    %23 = tpu.matmul %0, %16, %cst_13 {dimension_numbers = #tpu.dot_dimension_numbers<[2], [1], [1], [2], [0, 0, 0, 1, 1, 2], [0], [0]>} : vector<1x8x32xf32>, vector<1x32x128xf32>, vector<1x8x128xf32> -> vector<1x8x128xf32>
    "tpu.trace_stop"() : () -> ()
    %c0_14 = arith.constant 0 : index
    %24 = memref.load %arg5[%c0_14] : memref<1xf32, #tpu.memory_space<smem>>
    %cst_15 = arith.constant 3.125000e-02 : f32
    %25 = arith.mulf %24, %cst_15 : f32
    %cst_16 = arith.constant 2.000000e+00 : f32
    %26 = vector.broadcast %cst_16 : f32 to vector<1x8x128xf32>
    %27 = arith.mulf %26, %23 : vector<1x8x128xf32>
    %28 = vector.broadcast %19 : vector<1x8x1xf32> to vector<1x8x128xf32>
    %29 = arith.subf %27, %28 : vector<1x8x128xf32>
    %30 = vector.broadcast %22 : vector<1x1x128xf32> to vector<1x8x128xf32>
    %31 = arith.subf %29, %30 : vector<1x8x128xf32>
    %32 = vector.broadcast %25 : f32 to vector<1x8x128xf32>
    %33 = arith.mulf %32, %31 : vector<1x8x128xf32>
    %34 = vector.extract_strided_slice %33 {offsets = [0, 0, 0], sizes = [1, 8, 4], strides = [1, 1, 1]} : vector<1x8x128xf32> to vector<1x8x4xf32>
    %c0_17 = arith.constant 0 : index
    %c0_18 = arith.constant 0 : index
    %c0_19 = arith.constant 0 : index
    %35 = vector.load %arg6[%c0_17, %c0_18, %c0_19] : memref<1x8x4xf32, #tpu.memory_space<vmem>>, vector<1x8x4xf32>
    tpu.vector_store %arg6[%c0_17, %c0_18, %c0_19], %34 {strides = array<i32>} : memref<1x8x4xf32, #tpu.memory_space<vmem>>, vector<1x8x4xf32>,
    return
  }
  func.func @transform_0(%arg0: i32, %arg1: i32) -> (i32, i32, i32) {
    %c0_i32 = arith.constant 0 : i32
    %c0_i32_0 = arith.constant 0 : i32
    %c0_i32_1 = arith.constant 0 : i32
    return %arg0, %c0_i32, %c0_i32_0 : i32, i32, i32
  }
  func.func @transform_1(%arg0: i32, %arg1: i32) -> (i32, i32, i32) {
    %c0_i32 = arith.constant 0 : i32
    %c0_i32_0 = arith.constant 0 : i32
    return %arg0, %arg1, %c0_i32 : i32, i32, i32
  }
  func.func @transform_2(%arg0: i32, %arg1: i32) -> (i32, i32, i32) {
    %c0_i32 = arith.constant 0 : i32
    %c0_i32_0 = arith.constant 0 : i32
    %c0_i32_1 = arith.constant 0 : i32
    return %arg0, %c0_i32, %c0_i32_0 : i32, i32, i32
  }
  func.func @transform_3(%arg0: i32, %arg1: i32) -> i32 {
    %c0_i32 = arith.constant 0 : i32
    %c0_i32_0 = arith.constant 0 : i32
    return %c0_i32 : i32
  }
  func.func @transform_4(%arg0: i32, %arg1: i32) -> (i32, i32, i32) {
    %c0_i32 = arith.constant 0 : i32
    %c0_i32_0 = arith.constant 0 : i32
    return %arg0, %arg1, %c0_i32 : i32, i32, i32
  }
}

</mosaic_0001>

<llo_original>
// kernel: tpu_custom_call.1
$region0: #{tpu_custom_call.1}
  #allocation0 [shape = 'u32[]', space=smem, size = 0x4, offset = 0x4, fixed_abs, tag = 'smem constant byte address 0x4 - core index']
  #allocation1 [shape = 'u32[72,128]{1,0:T(1,128)}', space=vmem, size = 0x9000, scoped, tag = 'internal scratch']
  #allocation2 [shape = 'f32[1]{0:T(128)S(6)}', space=smem, size = 0x200, scoped, tag = 'scoped memory for tpu_custom_call.1']
  %s0 = inlined_call_operand.vmem [shape: s32[2,8,1], index: 0, kind: input, shape index: {}]
  %s1 = inlined_call_operand.vmem [shape: f32[2,8,32], index: 1, kind: input, shape index: {}]
  %s2 = inlined_call_operand.hbm [shape: f32[2,8,32], index: 2, kind: input, shape index: {}]
  %s3 = inlined_call_operand.<no memory space> [shape: f32[1], index: 3, kind: input, shape index: {}]
  %s4 = inlined_call_operand.vmem [shape: f32[2,8,4], index: 4, kind: output, shape index: {}]
  %s5 = sld [smem:[#allocation0]]
  $region53: #{tpu_custom_call.1} parent=0
    _
  %s7 = ssub.s32 1, %s5
  %s8 = scalar_select 0, %s7, %s5
  %9 = sst [smem:[#allocation2]] %s3
  $region1: #{tpu_custom_call.1} parent=0
    #allocation3 [shape = 'u8[8192]{0}', space=vmem, size = 0x2000, scoped, tag = 'input window, operand 2']
    #allocation4 [shape = 's32[2]{0}', space=sflag, size = 0x8, scoped, tag = 'scoped memory for tpu_custom_call.1']
    %10 = vsyncpa [#allocation4], 0
    %s11 = scalar_lea.sflag [#allocation4], 1
    %12 = vsyncpa %s11, 0
    loop: start=0, step=1, limit=4
    $region2: #{tpu_custom_call.1} parent=1 // loop_pre_header
      _
    $region3: #{tpu_custom_call.1} parent=1 // loop_header
      %s14 = sphi 0, %s18
      %p15 = scmp.ge.s32.totalorder %s14, 4
      %s21 = sphi 0, %s33
      %s22 = sphi 0, %s29
      %s23 = sphi 0, %s21
      %s24 = sphi 0, %s22
      %s25 = sphi 0, %s23
      %s26 = sphi 0, %s24
      %s36 = sphi 0, %s38
      %s39 = sphi 0, %s36
      %s40 = sphi 0, %s39
      %s56 = sphi 0, %s40
      %s64 = sphi 0, %s66
      %s67 = sphi 0, %s64
      %s68 = sphi 0, %s67
      %s84 = sphi 0, %s68
      %s90 = sphi 0, %s92
      %s93 = sphi 0, %s90
      %s94 = sphi 0, %s93
      %s110 = sphi 0, %s94
      %s114 = sphi 0, %s114
      %s116 = sphi 0, %s114
      %s117 = sphi 0, %s116
      %s131 = sphi 0, %s117
      %s139 = sphi 0, %s141
      %s142 = sphi 0, %s139
      %s143 = sphi 0, %s142
      %s159 = sphi 0, %s143
    $region4: #{tpu_custom_call.1} parent=1 // loop_header_branch
      %17 = sbr.rel (%p15) target = $region8
    $region5: #{tpu_custom_call.1} parent=1 // loop_body
      %s19 = ssub.s32 %s14, 1
      %s20 = ssub.s32 %s14, 2
      %s27 = sadd.s32 1, %s22
      %p28 = scmp.ge.s32.totalorder %s27, 1
      %s29 = scalar_select %p28, 0, %s27
      %s30 = sadd.s32 1, %s21
      %s31 = scalar_select %p28, %s30, %s21
      %p32 = scmp.ge.s32.totalorder %s31, 2
      %s33 = scalar_select %p32, 0, %s31
      %s34 = ssub.s32 %s21, %s33
      %p35 = scmp.eq.s32.totalorder %s34, 0
      %s37 = sadd.s32 %s36, 1
      %s38 = scalar_select %p35, %s36, %s37
      %p41 = pneg %p35
      %p42 = scmp.eq.s32.totalorder %s14, 1
      %p43 = por %p41, %p42
      %p44 = scmp.ne.s32.totalorder %s36, %s39
      %p45 = scmp.eq.s32.totalorder %s14, 0
      %p46 = por %p44, %p45
      %p47 = scmp.ne.s32.totalorder %s36, %s39
      %p48 = scmp.eq.s32.totalorder %s19, 1
      %p49 = por %p47, %p48
      %p50 = scmp.ne.s32.totalorder %s39, %s40
      %p51 = scmp.eq.s32.totalorder %s19, 0
      %p52 = por %p50, %p51
      %p53 = scmp.ne.s32.totalorder %s39, %s40
      %p54 = scmp.eq.s32.totalorder %s20, 1
      %p55 = por %p53, %p54
      %p57 = scmp.ne.s32.totalorder %s40, %s56
      %p58 = scmp.eq.s32.totalorder %s20, 0
      %p59 = por %p57, %p58
      %s60 = ssub.s32 %s21, %s33
      %s61 = ssub.s32 %s22, %s29
      %s62 = sor.u32 %s60, %s61
      %p63 = scmp.eq.s32.totalorder %s62, 0
      %s65 = sadd.s32 %s64, 1
      %s66 = scalar_select %p63, %s64, %s65
      %p69 = pneg %p63
      %p70 = scmp.eq.s32.totalorder %s14, 1
      %p71 = por %p69, %p70
      %p72 = scmp.ne.s32.totalorder %s64, %s67
      %p73 = scmp.eq.s32.totalorder %s14, 0
      %p74 = por %p72, %p73
      %p75 = scmp.ne.s32.totalorder %s64, %s67
      %p76 = scmp.eq.s32.totalorder %s19, 1
      %p77 = por %p75, %p76
      %p78 = scmp.ne.s32.totalorder %s67, %s68
      %p79 = scmp.eq.s32.totalorder %s19, 0
      %p80 = por %p78, %p79
      %p81 = scmp.ne.s32.totalorder %s67, %s68
      %p82 = scmp.eq.s32.totalorder %s20, 1
      %p83 = por %p81, %p82
      %p85 = scmp.ne.s32.totalorder %s68, %s84
      %p86 = scmp.eq.s32.totalorder %s20, 0
      %p87 = por %p85, %p86
      %s88 = ssub.s32 %s21, %s33
      %p89 = scmp.eq.s32.totalorder %s88, 0
      %s91 = sadd.s32 %s90, 1
      %s92 = scalar_select %p89, %s90, %s91
      %p95 = pneg %p89
      %p96 = scmp.eq.s32.totalorder %s14, 1
      %p97 = por %p95, %p96
      %p98 = scmp.ne.s32.totalorder %s90, %s93
      %p99 = scmp.eq.s32.totalorder %s14, 0
      %p100 = por %p98, %p99
      %p101 = scmp.ne.s32.totalorder %s90, %s93
      %p102 = scmp.eq.s32.totalorder %s19, 1
      %p103 = por %p101, %p102
      %p104 = scmp.ne.s32.totalorder %s93, %s94
      %p105 = scmp.eq.s32.totalorder %s19, 0
      %p106 = por %p104, %p105
      %p107 = scmp.ne.s32.totalorder %s93, %s94
      %p108 = scmp.eq.s32.totalorder %s20, 1
      %p109 = por %p107, %p108
      %p111 = scmp.ne.s32.totalorder %s94, %s110
      %p112 = scmp.eq.s32.totalorder %s20, 0
      %p113 = por %p111, %p112
      %s115 = sadd.s32 %s114, 1
      %p118 = scmp.eq.s32.totalorder %s14, 1
      %p119 = scmp.ne.s32.totalorder %s114, %s116
      %p120 = scmp.eq.s32.totalorder %s14, 0
      %p121 = por %p119, %p120
      %p122 = scmp.ne.s32.totalorder %s114, %s116
      %p123 = scmp.eq.s32.totalorder %s19, 1
      %p124 = por %p122, %p123
      %p125 = scmp.ne.s32.totalorder %s116, %s117
      %p126 = scmp.eq.s32.totalorder %s19, 0
      %p127 = por %p125, %p126
      %p128 = scmp.ne.s32.totalorder %s116, %s117
      %p129 = scmp.eq.s32.totalorder %s20, 1
      %p130 = por %p128, %p129
      %p132 = scmp.ne.s32.totalorder %s117, %s131
      %p133 = scmp.eq.s32.totalorder %s20, 0
      %p134 = por %p132, %p133
      %s135 = ssub.s32 %s21, %s33
      %s136 = ssub.s32 %s22, %s29
      %s137 = sor.u32 %s135, %s136
      %p138 = scmp.eq.s32.totalorder %s137, 0
      %s140 = sadd.s32 %s139, 1
      %s141 = scalar_select %p138, %s139, %s140
      %p144 = pneg %p138
      %p145 = scmp.eq.s32.totalorder %s14, 1
      %p146 = por %p144, %p145
      %p147 = scmp.ne.s32.totalorder %s139, %s142
      %p148 = scmp.eq.s32.totalorder %s14, 0
      %p149 = por %p147, %p148
      %p150 = scmp.ne.s32.totalorder %s139, %s142
      %p151 = scmp.eq.s32.totalorder %s19, 1
      %p152 = por %p150, %p151
      %p153 = scmp.ne.s32.totalorder %s142, %s143
      %p154 = scmp.eq.s32.totalorder %s19, 0
      %p155 = por %p153, %p154
      %p156 = scmp.ne.s32.totalorder %s142, %s143
      %p157 = scmp.eq.s32.totalorder %s20, 1
      %p158 = por %p156, %p157
      %p160 = scmp.ne.s32.totalorder %s143, %s159
      %p161 = scmp.eq.s32.totalorder %s20, 0
      %p162 = por %p160, %p161
      %p163 = scmp.le.s32.totalorder 1, %s14
      %p164 = scmp.lt.s32.totalorder %s14, 3
      %p165 = pnand %p163, %p164
      %p166 = pneg %p165
      // Predicated region
      $region9: #{tpu_custom_call.1} parent=5 // pred_check
        _
      $region10: #{tpu_custom_call.1} parent=5 // pred_check_branch
        %168 = sbr.rel (%p165) target = $region12
      $region11: #{tpu_custom_call.1} parent=5 // pred_region
        %s169 = ssub.s32 %s14, 1
        // Predicated region
        $region13: #{tpu_custom_call.1} parent=11 // pred_check
          %p170 = pneg %p127
        $region14: #{tpu_custom_call.1} parent=11 // pred_check_branch
          %172 = sbr.rel (%p170) target = $region16
        $region15: #{tpu_custom_call.1} parent=11 // pred_region
          _
        $region16: #{tpu_custom_call.1} parent=11 // pred_fallthru
          _
      $region12: #{tpu_custom_call.1} parent=5 // pred_fallthru
        _
      %p173 = scmp.lt.s32.totalorder %s14, 2
      // Predicated region
      $region17: #{tpu_custom_call.1} parent=5 // pred_check
        %p174 = pneg %p173
      $region18: #{tpu_custom_call.1} parent=5 // pred_check_branch
        %176 = sbr.rel (%p174) target = $region20
      $region19: #{tpu_custom_call.1} parent=5 // pred_region
        // Predicated region
        $region21: #{tpu_custom_call.1} parent=19 // pred_check
          %p177 = pneg %p46
        $region22: #{tpu_custom_call.1} parent=19 // pred_check_branch
          %179 = sbr.rel (%p177) target = $region24
        $region23: #{tpu_custom_call.1} parent=19 // pred_region
          %p180 = scmp.lt.s32.totalorder %s21, 1
          %s181 = scalar_select %p180, %s21, 1
          %s182 = smul.addr %s181, 8
          %s183 = scalar_lea.vmem %s0, %s182
        $region24: #{tpu_custom_call.1} parent=19 // pred_fallthru
          _
        // Predicated region
        $region25: #{tpu_custom_call.1} parent=19 // pred_check
          %p184 = pneg %p74
        $region26: #{tpu_custom_call.1} parent=19 // pred_check_branch
          %186 = sbr.rel (%p184) target = $region28
        $region27: #{tpu_custom_call.1} parent=19 // pred_region
          %p187 = scmp.lt.s32.totalorder %s21, 1
          %s188 = scalar_select %p187, %s21, 1
          %p189 = scmp.lt.s32.totalorder %s22, 0
          %s190 = scalar_select %p189, %s22, 0
          %s191 = sadd.s32 %s190, %s188
          %s192 = smul.addr %s191, 8
          %s193 = scalar_lea.vmem %s1, %s192
        $region28: #{tpu_custom_call.1} parent=19 // pred_fallthru
          _
        // Predicated region
        $region29: #{tpu_custom_call.1} parent=19 // pred_check
          %p194 = pneg %p100
        $region30: #{tpu_custom_call.1} parent=19 // pred_check_branch
          %196 = sbr.rel (%p194) target = $region32
        $region31: #{tpu_custom_call.1} parent=19 // pred_region
          %s197 = sand.u32 %s90, 1
          %s198 = scalar_lea.sflag [#allocation4], %s197
          %s199 = sand.u32 %s90, 1
          %s200 = smul.addr %s199, 8
          %s201 = scalar_lea.vmem [#allocation3], %s200
          %203 = vsyncadd %s198, 0
          %s204 = smul.addr %s21, 8
          %s205 = scalar_lea.hbm %s2, %s204
          %s207 = sshll.u32 %s205, 4
          %s208 = int_to_ptr.hbm [resolvable:$true] %s207
          %s209 = sshll.u32 %s201, 4
          %s210 = int_to_ptr.vmem [resolvable:$true] %s209
          %212 = dma.hbm_to_vmem [thread:$0]  %s208, 128, %s210, %s198
        $region32: #{tpu_custom_call.1} parent=19 // pred_fallthru
          _
      $region20: #{tpu_custom_call.1} parent=5 // pred_fallthru
        _
      %p213 = scmp.le.s32.totalorder 1, %s14
      %p214 = scmp.lt.s32.totalorder %s14, 3
      %p215 = pnand %p213, %p214
      %p216 = pneg %p215
      // Predicated region
      $region33: #{tpu_custom_call.1} parent=5 // pred_check
        _
      $region34: #{tpu_custom_call.1} parent=5 // pred_check_branch
        %218 = sbr.rel (%p215) target = $region36
      $region35: #{tpu_custom_call.1} parent=5 // pred_region
        %s219 = ssub.s32 %s14, 1
        %s220 = sand.u32 %s93, 1
        %s221 = scalar_lea.sflag [#allocation4], %s220
        %s222 = sand.u32 %s93, 1
        %s223 = smul.addr %s222, 8
        %s224 = scalar_lea.vmem [#allocation3], %s223
        // Predicated region
        $region37: #{tpu_custom_call.1} parent=35 // pred_check
          %p225 = pneg %p106
        $region38: #{tpu_custom_call.1} parent=35 // pred_check_branch
          %227 = sbr.rel (%p225) target = $region40
        $region39: #{tpu_custom_call.1} parent=35 // pred_region
          %229 = dma.done %s221, 128
        $region40: #{tpu_custom_call.1} parent=35 // pred_fallthru
          _
        %p230 = scmp.lt.s32.totalorder %s23, 1
        %s231 = scalar_select %p230, %s23, 1
        %s232 = smul.addr %s231, 8
        %s233 = scalar_lea.vmem %s0, %s232
        %p234 = pneg %p52
        %p235 = pneg %p49
        %p236 = scmp.lt.s32.totalorder %s23, 1
        %s237 = scalar_select %p236, %s23, 1
        %p238 = scmp.lt.s32.totalorder %s24, 0
        %s239 = scalar_select %p238, %s24, 0
        %s240 = sadd.s32 %s239, %s237
        %s241 = smul.addr %s240, 8
        %s242 = scalar_lea.vmem %s1, %s241
        %p243 = pneg %p80
        %p244 = pneg %p77
        %s245 = sand.u32 %s93, 1
        %s246 = scalar_lea.sflag [#allocation4], %s245
        %s247 = sand.u32 %s93, 1
        %s248 = smul.addr %s247, 8
        %s249 = scalar_lea.vmem [#allocation3], %s248
        %p250 = pneg %p106
        %p251 = pneg %p103
        %p252 = pneg %p127
        %p253 = pneg %p124
        %p254 = pneg %p155
        %p255 = pneg %p152
        %p256 = scmp.lt.s32.totalorder %s23, 1
        %s257 = scalar_select %p256, %s23, 1
        %p258 = scmp.lt.s32.totalorder %s24, 0
        %s259 = scalar_select %p258, %s24, 0
        %s260 = sadd.s32 %s259, %s257
        %s261 = smul.addr %s260, 8
        %s262 = scalar_lea.vmem %s4, %s261
        %p263 = scmp.lt.s32.totalorder %s23, 1
        %s264 = scalar_select %p263, %s23, 1
        %s265 = smul.addr %s264, 8
        %s266 = scalar_lea.vmem %s0, %s265
        %p267 = scmp.lt.s32.totalorder %s23, 1
        %s268 = scalar_select %p267, %s23, 1
        %p269 = scmp.lt.s32.totalorder %s24, 0
        %s270 = scalar_select %p269, %s24, 0
        %s271 = sadd.s32 %s270, %s268
        %s272 = smul.addr %s271, 8
        %s273 = scalar_lea.vmem %s1, %s272
        %p274 = scmp.lt.s32.totalorder %s23, 1
        %s275 = scalar_select %p274, %s23, 1
        %p276 = scmp.lt.s32.totalorder %s24, 0
        %s277 = scalar_select %p276, %s24, 0
        %s278 = sadd.s32 %s277, %s275
        %s279 = smul.addr %s278, 8
        %s280 = scalar_lea.vmem %s4, %s279
        %v281 = vld [vmem:[%s273] sm:$0xff]
        %v282 = vld [vmem:[%s224] sm:$0xff]
        %v283 = vld [vmem:[%s266] sm:$0xff]
        %v284 = vlaneseq
        %v285 = vand.u32 %v284, 127
        %286 = vset.pattern.permute.xlu0 0
        %287 = vperm.xlu0 %286, %v283
        %v288 = vpop.permute.xlu0 %287
        %vm289 = vcmp.eq.s32.totalorder %v288, %v285
        %v290 = vsel %vm289, 1, 0
        %v291 = vcvt.s32.f32 %v290
        %v292 = vrot.slane %v291, 4
        %v293 = vadd.f32 %v291, %v292
        %v294 = vrot.slane %v293, 2
        %v295 = vadd.f32 %v293, %v294
        %v296 = vrot.slane %v295, 1
        %v297 = vadd.f32 %v295, %v296
        %v298 = vmax.f32 %v297, 1.0
        %v299 = vrcp.pop %v298
        %v300 = vmul.f32 %v298, %v299
        %v301 = vsub.f32 1.0, %v300
        %v302 = vmul.f32 %v299, %v301
        %v303 = vadd.f32 %v299, %v302
        %vm304 = vweird.f32 %v298
        %vm305 = vweird.f32 %v299
        %vm306 = vmor %vm304, %vm305
        %v307 = vsel %vm306, %v299, %v303
        %v308 = vand.u32 2147483647, %v298
        %vm309 = vcmp.eq.f32.partialorder %v308, 8.507059e+37
        %v310 = vand.u32 %v298, 2147483648
        %v311 = vor.u32 1.1754944e-38, %v310
        %v312 = vsel %vm309, %v311, %v307
        %v313 = vmul.f32 1.0, %v312
        %314 = vxpose.xlu0.b32.start [1/16] %v282, 128
        %315 = vxpose.xlu0.b32.cont [2/16] 0.0, 128
        %316 = vxpose.xlu0.b32.cont [3/16] 0.0, 128
        %317 = vxpose.xlu0.b32.cont [4/16] 0.0, 128
        %318 = vxpose.xlu0.b32.cont [5/16] 0.0, 128
        %319 = vxpose.xlu0.b32.cont [6/16] 0.0, 128
        %320 = vxpose.xlu0.b32.cont [7/16] 0.0, 128
        %321 = vxpose.xlu0.b32.cont [8/16] 0.0, 128
        %322 = vxpose.xlu0.b32.cont [9/16] 0.0, 128
        %323 = vxpose.xlu0.b32.cont [10/16] 0.0, 128
        %324 = vxpose.xlu0.b32.cont [11/16] 0.0, 128
        %325 = vxpose.xlu0.b32.cont [12/16] 0.0, 128
        %326 = vxpose.xlu0.b32.cont [13/16] 0.0, 128
        %327 = vxpose.xlu0.b32.cont [14/16] 0.0, 128
        %328 = vxpose.xlu0.b32.cont [15/16] 0.0, 128
        %329 = vxpose.xlu0.b32.end [16/16] 0.0, 128
        %v330 = vpop.trf.xlu0
        %v331 = vpop.trf.xlu0
        %v332 = vpop.trf.xlu0
        %v333 = vpop.trf.xlu0
        %v334 = vpop.trf.xlu0
        %v335 = vpop.trf.xlu0
        %v336 = vpop.trf.xlu0
        %v337 = vpop.trf.xlu0
        %v338 = vpop.trf.xlu0
        %v339 = vpop.trf.xlu0
        %v340 = vpop.trf.xlu0
        %v341 = vpop.trf.xlu0
        %v342 = vpop.trf.xlu0
        %v343 = vpop.trf.xlu0
        %v344 = vpop.trf.xlu0
        %v345 = vpop.trf.xlu0
        %vm346 = vcmask 64512
        %v348 = vsel %vm346, %v330, 0
        %v351 = vsel %vm346, %v331, 0
        %v354 = vsel %vm346, %v332, 0
        %v357 = vsel %vm346, %v333, 0
        %359 = vmatpush.msra.mxu0 0.0
        %360 = vmatpush.msra.mxu0 0.0
        %361 = vmatpush.msra.mxu0 0.0
        %362 = vmatpush.msra.mxu0 0.0
        %363 = vmatpush.msra.mxu0 0.0
        %364 = vmatpush.msra.mxu0 0.0
        %365 = vmatpush.msra.mxu0 0.0
        %366 = vmatpush.msra.mxu0 0.0
        %367 = vmatpush.msra.mxu0 0.0
        %368 = vmatpush.msra.mxu0 0.0
        %369 = vmatpush.msra.mxu0 0.0
        %370 = vmatpush.msra.mxu0 0.0
        %371 = vmatpush.msra.mxu0 0.0
        %372 = vmatpush.msra.mxu0 0.0
        %373 = vmatpush.msra.mxu0 0.0
        %374 = vmatpush.msra.mxu0 %v291
        %375 = vmatmul.f32.gmra.mxu0 %v348
        %v376 = vpop.f32.mrf.mxu0
        %v377 = vadd.f32 0.0, %v376
        %378 = vmatmul.f32.gmra.mxu0 %v351
        %v379 = vpop.f32.mrf.mxu0
        %v380 = vadd.f32 0.0, %v379
        %381 = vmatmul.f32.gmra.mxu0 %v354
        %v382 = vpop.f32.mrf.mxu0
        %v383 = vadd.f32 0.0, %v382
        %384 = vmatmul.f32.gmra.mxu0 %v357
        %v385 = vpop.f32.mrf.mxu0
        %v386 = vadd.f32 0.0, %v385
        %387 = vdwg.mxu0
        %v388 = vmul.f32 %v377, %v313
        %v389 = vmul.f32 %v380, %v313
        %v390 = vmul.f32 %v383, %v313
        %v391 = vmul.f32 %v386, %v313
        %v392 = vmul.f32 %v281, %v281
        %vm393 = vcmask 261120
        %v394 = vsel %vm393, %v392, 0.0
        %395 = vadd.xlane.f32.xlu0 %v394
        %v396 = vpop.xlane.xlu0 %395
        %v397 = vmul.f32 %v388, %v388
        %v398 = vmul.f32 %v389, %v389
        %v399 = vmul.f32 %v390, %v390
        %v400 = vmul.f32 %v391, %v391
        %v401 = vadd.f32 %v397, %v398
        %v402 = vadd.f32 %v401, %v399
        %v403 = vadd.f32 %v402, %v400
        %v404 = vrot.slane %v403, 4
        %v405 = vadd.f32 %v403, %v404
        %v406 = vrot.slane %v405, 2
        %v407 = vadd.f32 %v405, %v406
        %v408 = vrot.slane %v407, 1
        %v409 = vadd.f32 %v407, %v408
        %v411 = vsel %vm393, %v281, 0
        %413 = vmatpush.msra.mxu0 0.0
        %414 = vmatpush.msra.mxu0 0.0
        %415 = vmatpush.msra.mxu0 0.0
        %416 = vmatpush.msra.mxu0 0.0
        %417 = vmatpush.msra.mxu0 0.0
        %418 = vmatpush.msra.mxu0 0.0
        %419 = vmatpush.msra.mxu0 0.0
        %420 = vmatpush.msra.mxu0 0.0
        %421 = vmatpush.msra.mxu0 0.0
        %422 = vmatpush.msra.mxu0 0.0
        %423 = vmatpush.msra.mxu0 0.0
        %424 = vmatpush.msra.mxu0 0.0
        %425 = vmatpush.msra.mxu0 %v391
        %426 = vmatpush.msra.mxu0 %v390
        %427 = vmatpush.msra.mxu0 %v389
        %428 = vmatpush.msra.mxu0 %v388
        %429 = vmatmul.f32.gmra.mxu0 %v411
        %v430 = vpop.f32.mrf.mxu0
        %v431 = vadd.f32 0.0, %v430
        %432 = vdwg.mxu0
        %s433 = sld [smem:[#allocation2]]
        %s434 = smul.f32 %s433, 0.03125
        %v435 = vmul.f32 %v431, 2.0
        %v436 = vsub.f32 %v435, %v396
        %v437 = vsub.f32 %v436, %v409
        %v438 = vstv %s434
        %v439 = vmul.f32 %v438, %v437
        %vm440 = vcmask 31744
        %441 = vst.msk [vmem:[%s280] sm:$0xff] %vm440, %v439
        %p442 = scmp.lt.s32.totalorder %s23, 1
        %s443 = scalar_select %p442, %s23, 1
        %p444 = scmp.lt.s32.totalorder %s24, 0
        %s445 = scalar_select %p444, %s24, 0
        %s446 = sadd.s32 %s445, %s443
        %s447 = smul.addr %s446, 8
        %s448 = scalar_lea.vmem %s4, %s447
        // Predicated region
        $region41: #{tpu_custom_call.1} parent=35 // pred_check
          %p449 = pneg %p152
        $region42: #{tpu_custom_call.1} parent=35 // pred_check_branch
          %451 = sbr.rel (%p449) target = $region44
        $region43: #{tpu_custom_call.1} parent=35 // pred_region
          _
        $region44: #{tpu_custom_call.1} parent=35 // pred_fallthru
          _
      $region36: #{tpu_custom_call.1} parent=5 // pred_fallthru
        _
      %p452 = scmp.le.s32.totalorder 2, %s14
      // Predicated region
      $region45: #{tpu_custom_call.1} parent=5 // pred_check
        %p453 = pneg %p452
      $region46: #{tpu_custom_call.1} parent=5 // pred_check_branch
        %455 = sbr.rel (%p453) target = $region48
      $region47: #{tpu_custom_call.1} parent=5 // pred_region
        %s456 = ssub.s32 %s14, 2
        // Predicated region
        $region49: #{tpu_custom_call.1} parent=47 // pred_check
          %p457 = pneg %p158
        $region50: #{tpu_custom_call.1} parent=47 // pred_check_branch
          %459 = sbr.rel (%p457) target = $region52
        $region51: #{tpu_custom_call.1} parent=47 // pred_region
          %p460 = scmp.lt.s32.totalorder %s25, 1
          %s461 = scalar_select %p460, %s25, 1
          %p462 = scmp.lt.s32.totalorder %s26, 0
          %s463 = scalar_select %p462, %s26, 0
          %s464 = sadd.s32 %s463, %s461
          %s465 = smul.addr %s464, 8
          %s466 = scalar_lea.vmem %s4, %s465
        $region52: #{tpu_custom_call.1} parent=47 // pred_fallthru
          _
      $region48: #{tpu_custom_call.1} parent=5 // pred_fallthru
        _
    $region6: #{tpu_custom_call.1} parent=1 // loop_footer
      %s18 = sadd.s32 1, %s14
    $region7: #{tpu_custom_call.1} parent=1 // loop_footer_branch
      %13 = sbr.rel target = $region3
    $region8: #{tpu_custom_call.1} parent=1 // loop_exit
      _
    %467 = vsyncpa [#allocation4], 1
    %s468 = scalar_lea.sflag [#allocation4], 1
    %469 = vsyncpa %s468, 1

</llo_original>
